<compile_context>
chip_gen: v7x
topology: tpu7x:2x2x1
jax: 0.10.0
libtpu: 0.0.40
codegen_flags: <defaults>
</compile_context>

<pallas_src>
import numpy as np

import jax
import jax.numpy as jnp
from jax.experimental import pallas as pl
from jax.experimental.pallas import tpu as pltpu


_VMEM_LIMIT_BYTES = 48 * 1024 * 1024   # safe on v5e/v6e (128 MiB) and v7x (64 MiB)


def _pick_spatial_tile(HW, C1, Co, budget_bytes=6 * 1024 * 1024):
    """Lane-dense spatial tile for the 1x1-conv kernel (multiple of 128 or full)."""
    if HW <= 1024:
        return int(HW)
    per_col = 4 * 2 * (C1 + Co)          # f32 in + out blocks, double-buffered
    t = budget_bytes // max(per_col, 1)
    t = max(128, min((t // 128) * 128, 4096))
    return int(HW) if t >= HW else int(t)


def _pick_channel_tile(C, H, W, budget_bytes=8 * 1024 * 1024):
    """Channel tile for the depthwise kernel (full C, or a multiple of 128)."""
    if C <= 128:
        return int(C)
    per_c = 4 * (2 * 2 * H * W + (H + 4) * (W + 4))   # in+out (double-buffered) + pad scratch
    k = max(1, budget_bytes // (128 * per_c))
    ct = 128 * int(k)
    return int(C) if ct >= C else ct


# ---------------------------------------------------------------------------
# Kernel A: 1x1 conv (BN folded) + SiLU, channels-last, bf16 MXU matmul.
# ---------------------------------------------------------------------------
def _pointwise_conv_silu(x_nhwc, w, b, cast_dtype):
    """x_nhwc: (B, HW, C1) f32; w: (C1, Co) cast_dtype; b: (1, Co) f32 -> (B, HW, Co) f32."""
    B, HW, C1 = x_nhwc.shape
    Co = w.shape[1]
    T = _pick_spatial_tile(HW, C1, Co)

    def kernel(x_ref, w_ref, b_ref, o_ref):
        xv = x_ref[...].astype(cast_dtype)                     # (T, C1) -> matmul dtype
        y = jnp.dot(xv, w_ref[...], preferred_element_type=jnp.float32)   # (T, Co) f32
        y = y + b_ref[...]                                     # per-channel bias (lanes)
        o_ref[...] = y * jax.nn.sigmoid(y)                     # SiLU in f32

    return pl.pallas_call(
        kernel,
        out_shape=jax.ShapeDtypeStruct((B, HW, Co), jnp.float32),
        grid_spec=pltpu.PrefetchScalarGridSpec(
            num_scalar_prefetch=0,
            grid=(B, pl.cdiv(HW, T)),
            in_specs=[
                pl.BlockSpec((pl.Squeezed(), T, C1), lambda bb, t: (bb, t, 0)),
                pl.BlockSpec((C1, Co), lambda bb, t: (0, 0)),   # resident weight
                pl.BlockSpec((1, Co), lambda bb, t: (0, 0)),    # resident bias
            ],
            out_specs=pl.BlockSpec((pl.Squeezed(), T, Co), lambda bb, t: (bb, t, 0)),
        ),
        compiler_params=pltpu.CompilerParams(
            dimension_semantics=("parallel", "parallel"),
            vmem_limit_bytes=_VMEM_LIMIT_BYTES),
    )(x_nhwc, w, b)


# ---------------------------------------------------------------------------
# Kernel B: 5x5 depthwise conv, stride 1, pad 2 (BN folded) + SiLU, channels-last.
# ---------------------------------------------------------------------------
def _depthwise5x5_silu(x1, w_taps, b):
    """x1: (B, H, W, C) f32; w_taps: (25, C) f32; b: (1, C) f32 -> (B, H, W, C) f32."""
    B, H, W, C = x1.shape
    Ct = _pick_channel_tile(C, H, W)

    def kernel(x_ref, w_ref, b_ref, o_ref, xpad_ref):
        # x_ref: (H, W, Ct); xpad_ref: (H+4, W+4, Ct) VMEM scratch.
        # Zero only the four 2-wide halo strips; the interior is fully overwritten.
        zrow = jnp.zeros((2, W + 4, Ct), jnp.float32)
        zcol = jnp.zeros((H, 2, Ct), jnp.float32)
        xpad_ref[0:2, :, :] = zrow
        xpad_ref[H + 2:H + 4, :, :] = zrow
        xpad_ref[2:H + 2, 0:2, :] = zcol
        xpad_ref[2:H + 2, W + 2:W + 4, :] = zcol
        xpad_ref[2:H + 2, 2:W + 2, :] = x_ref[...]

        wv = w_ref[...]                                        # (25, Ct) dense tap table
        acc = jnp.zeros((H, W, Ct), jnp.float32)
        for di in range(5):
            for dj in range(5):
                tap = wv[di * 5 + dj].reshape(1, 1, Ct)        # aligned lane vector
                # Shifts are along leading/sublane dims only: lane axis (channels)
                # stays aligned for every one of the 25 reads.
                acc = acc + xpad_ref[di:di + H, dj:dj + W, :] * tap
        y = acc + b_ref[...].reshape(1, 1, Ct)
        o_ref[...] = y * jax.nn.sigmoid(y)                     # SiLU

    return pl.pallas_call(
        kernel,
        out_shape=jax.ShapeDtypeStruct((B, H, W, C), jnp.float32),
        grid_spec=pltpu.PrefetchScalarGridSpec(
            num_scalar_prefetch=0,
            grid=(B, pl.cdiv(C, Ct)),
            in_specs=[
                pl.BlockSpec((pl.Squeezed(), H, W, Ct), lambda bb, c: (bb, 0, 0, c)),
                pl.BlockSpec((25, Ct), lambda bb, c: (0, c)),
                pl.BlockSpec((1, Ct), lambda bb, c: (0, c)),
            ],
            out_specs=pl.BlockSpec((pl.Squeezed(), H, W, Ct),
                                   lambda bb, c: (bb, 0, 0, c)),
            scratch_shapes=[pltpu.VMEM((H + 4, W + 4, Ct), jnp.float32)],
        ),
        compiler_params=pltpu.CompilerParams(
            dimension_semantics=("parallel", "parallel"),
            vmem_limit_bytes=_VMEM_LIMIT_BYTES),
    )(x1, w_taps, b)


# ---------------------------------------------------------------------------
# GSConv forward (defaults k=1, s=1, g=1), inference-mode BatchNorm.
# ---------------------------------------------------------------------------
def gsconv_forward(x, w_cv1, bn1, w_cv2, bn2, eps=1e-5, matmul_dtype=jnp.bfloat16):
    """
    x     : (B, C1, H, W) float32
    w_cv1 : (c_, C1, 1, 1)  cv1 1x1 conv weight (bias=False)
    bn1   : (gamma, beta, running_mean, running_var), each (c_,)
    w_cv2 : (c_, 1, 5, 5)   cv2 depthwise conv weight (groups=c_)
    bn2   : (gamma, beta, running_mean, running_var), each (c_,)
    Returns (B, 2*c_, H, W) float32.
    """
    B, C1, H, W = x.shape
    c_ = w_cv1.shape[0]
    x = x.astype(jnp.float32)

    # Even-then-odd channel permutation: with weights permuted this way, the
    # GSConv shuffle reduces to 4 contiguous channel runs of the kernel outputs.
    p = np.concatenate([np.arange(0, c_, 2), np.arange(1, c_, 2)])

    # Fold BatchNorm into the convolutions (inference semantics), permute channels.
    g1, be1, m1, v1 = [jnp.asarray(t, jnp.float32) for t in bn1]
    s1 = g1 / jnp.sqrt(v1 + eps)
    w1 = w_cv1.reshape(c_, C1).astype(jnp.float32) * s1[:, None]
    b1 = be1 - m1 * s1
    w1 = jnp.transpose(w1[p], (1, 0)).astype(matmul_dtype)     # (C1, c_), bf16 for MXU
    b1 = b1[p].reshape(1, c_)                                  # f32 bias

    g2, be2, m2, v2 = [jnp.asarray(t, jnp.float32) for t in bn2]
    s2 = g2 / jnp.sqrt(v2 + eps)
    w2 = w_cv2.reshape(c_, 25).astype(jnp.float32) * s2[:, None]
    b2 = be2 - m2 * s2
    w2 = jnp.transpose(w2[p], (1, 0))                          # (25, c_) dense tap table
    b2 = b2[p].reshape(1, c_)

    # Channels-last internal layout (single XLA layout pass over x).
    x_nhwc = jnp.transpose(x, (0, 2, 3, 1)).reshape(B, H * W, C1)

    # cv1: 1x1 conv + BN + SiLU  (Pallas kernel A, bf16 MXU matmul)
    x1 = _pointwise_conv_silu(x_nhwc, w1, b1, matmul_dtype)    # (B, HW, c_) f32, perm. channels
    x1 = x1.reshape(B, H, W, c_)

    # cv2: 5x5 depthwise conv + BN + SiLU  (Pallas kernel B, channels-last)
    xb = _depthwise5x5_silu(x1, w2, b2)                        # (B, H, W, c_) f32, perm. channels

    # Fused channel shuffle: 4 contiguous slices + the (required) NHWC->NCHW pass.
    ne, no = (c_ + 1) // 2, c_ // 2
    sxb2 = 0 if c_ % 2 == 0 else ne
    sxb4 = ne if c_ % 2 == 0 else 0
    out_nhwc = jnp.concatenate(
        [x1[..., :ne], xb[..., sxb2:sxb2 + no],
         x1[..., ne:], xb[..., sxb4:sxb4 + ne]], axis=-1)      # (B, H, W, 2c_)
    return jnp.transpose(out_nhwc, (0, 3, 1, 2))               # (B, 2c_, H, W)


# ---------------------------------------------------------------------------
# Pure-JAX reference replicating the PyTorch forward (eval-mode BN).
# ---------------------------------------------------------------------------
def _reference(x, w_cv1, bn1, w_cv2, bn2, eps=1e-5, cv1_cast=None):
    def conv(inp, w, groups, dtype=jnp.float32):
        kh, kw = w.shape[2], w.shape[3]
        return jax.lax.conv_general_dilated(
            inp.astype(dtype), w.astype(dtype), (1, 1),
            [(kh // 2, kh // 2), (kw // 2, kw // 2)],
            dimension_numbers=('NCHW', 'OIHW', 'NCHW'),
            feature_group_count=groups,
            preferred_element_type=jnp.float32)

    def bn_apply(y, params):
        g, b, m, v = params
        return ((y - m[None, :, None, None]) / jnp.sqrt(v[None, :, None, None] + eps)
                * g[None, :, None, None] + b[None, :, None, None])

    def silu(y):
        return y * jax.nn.sigmoid(y)

    c_ = w_cv1.shape[0]
    if cv1_cast is None:
        x1 = silu(bn_apply(conv(x, w_cv1, 1), bn1))
    else:
        # Fold BN1 and cast the conv inputs exactly as the Pallas path does.
        g, bb, m, v = bn1
        s = g / jnp.sqrt(v + eps)
        wf = w_cv1 * s[:, None, None, None]
        bf = (bb - m * s)[None, :, None, None]
        x1 = silu(conv(x, wf, 1, dtype=cv1_cast) + bf)
    xb = silu(bn_apply(conv(x1, w_cv2, c_), bn2))

    x2 = jnp.concatenate([x1, xb], axis=1)
    b_, n, h, w = x2.shape
    y = x2.reshape(b_ * n // 2, 2, h * w)
    y = jnp.transpose(y, (1, 0, 2)).reshape(2, b_, n // 2, h, w)
    return jnp.concatenate([y[0], y[1]], axis=1)


if __name__ == "__main__":
    # Small shapes consistent with GSConv defaults: GSConv(c1=8, c2=8) -> c_ = 4.
    B, C1, C2, H, W = 2, 8, 8, 16, 16
    c_ = C2 // 2

    keys = jax.random.split(jax.random.PRNGKey(0), 11)
    x = jax.random.normal(keys[0], (B, C1, H, W), jnp.float32)

    w_cv1 = jax.random.normal(keys[1], (c_, C1, 1, 1), jnp.float32) * (1.0 / (C1 ** 0.5))
    bn1 = (jax.random.uniform(keys[2], (c_,), jnp.float32, 0.5, 1.5),
           jax.random.normal(keys[3], (c_,), jnp.float32) * 0.1,
           jax.random.normal(keys[4], (c_,), jnp.float32) * 0.1,
           jax.random.uniform(keys[5], (c_,), jnp.float32, 0.5, 1.5))

    w_cv2 = jax.random.normal(keys[6], (c_, 1, 5, 5), jnp.float32) * 0.2
    bn2 = (jax.random.uniform(keys[7], (c_,), jnp.float32, 0.5, 1.5),
           jax.random.normal(keys[8], (c_,), jnp.float32) * 0.1,
           jax.random.normal(keys[9], (c_,), jnp.float32) * 0.1,
           jax.random.uniform(keys[10], (c_,), jnp.float32, 0.5, 1.5))

    out = jax.block_until_ready(gsconv_forward(x, w_cv1, bn1, w_cv2, bn2))
    assert out.shape == (B, C2, H, W), out.shape

    # Tight check against a reference that uses the same bf16 rounding for cv1's
    # matmul inputs (everything else f32) -> validates all kernel math/layout.
    ref_match = _reference(x, w_cv1, bn1, w_cv2, bn2, cv1_cast=jnp.bfloat16)
    err = float(jnp.max(jnp.abs(out - ref_match)))
    assert err < 1e-3, err

    # Loose sanity check against the full-f32 PyTorch-equivalent reference: the
    # residual is only the intentional bf16 rounding of the 1x1-conv inputs.
    ref_f32 = _reference(x, w_cv1, bn1, w_cv2, bn2)
    err_f32 = float(jnp.max(jnp.abs(out - ref_f32)))
    assert err_f32 < 0.15, err_f32

    print("KERNEL_OK")
</pallas_src>

<mosaic_0001>
module attributes {stable_mosaic.version = 11 : i64} {
  func.func @kernel(%arg0: i32, %arg1: i32, %arg2: memref<1x256x8xf32, #tpu.memory_space<vmem>>, %arg3: memref<8x4xbf16, #tpu.memory_space<vmem>>, %arg4: memref<1x4xf32, #tpu.memory_space<vmem>>, %arg5: memref<1x256x4xf32, #tpu.memory_space<vmem>>) attributes {dimension_semantics = [#tpu.dimension_semantics<parallel>, #tpu.dimension_semantics<parallel>], iteration_bounds = array<i64: 2, 1>, scalar_prefetch = 0 : i64, scratch_operands = 0 : i64, tpu.core_type = #tpu.core_type<tc>, window_params = [{transform_indices = @transform_0, window_bounds = array<i64: 1, 256, 8>}, {pipeline_mode = #tpu.pipeline_mode<synchronous>, transform_indices = @transform_1, window_bounds = array<i64: 8, 4>}, {pipeline_mode = #tpu.pipeline_mode<synchronous>, transform_indices = @transform_2, window_bounds = array<i64: 1, 4>}, {transform_indices = @transform_3, window_bounds = array<i64: 1, 256, 4>}]} {
    %c0 = arith.constant 0 : index
    %c0_0 = arith.constant 0 : index
    %c0_1 = arith.constant 0 : index
    %0 = vector.load %arg2[%c0, %c0_0, %c0_1] : memref<1x256x8xf32, #tpu.memory_space<vmem>>, vector<1x256x8xf32>
    %1 = vector.shape_cast %0 : vector<1x256x8xf32> to vector<256x8xf32>
    %2 = arith.truncf %1 : vector<256x8xf32> to vector<256x8xbf16>
    %c0_2 = arith.constant 0 : index
    %c0_3 = arith.constant 0 : index
    %3 = vector.load %arg3[%c0_2, %c0_3] : memref<8x4xbf16, #tpu.memory_space<vmem>>, vector<8x4xbf16>
    %cst = arith.constant dense<0.000000e+00> : vector<256x4xf32>
    %4 = tpu.matmul %2, %3, %cst {dimension_numbers = #tpu.dot_dimension_numbers<[1], [0], [0], [1], [0, 0, 1, 1], [], []>} : vector<256x8xbf16>, vector<8x4xbf16>, vector<256x4xf32> -> vector<256x4xf32>
    %c0_4 = arith.constant 0 : index
    %c0_5 = arith.constant 0 : index
    %5 = vector.load %arg4[%c0_4, %c0_5] : memref<1x4xf32, #tpu.memory_space<vmem>>, vector<1x4xf32>
    %6 = vector.broadcast %5 : vector<1x4xf32> to vector<256x4xf32>
    %7 = arith.addf %4, %6 : vector<256x4xf32>
    %8 = arith.negf %7 : vector<256x4xf32>
    %9 = math.exp %8 : vector<256x4xf32>
    %cst_6 = arith.constant 1.000000e+00 : f32
    %10 = vector.broadcast %cst_6 : f32 to vector<256x4xf32>
    %11 = arith.addf %10, %9 : vector<256x4xf32>
    %12 = arith.divf %10, %11 : vector<256x4xf32>
    %13 = arith.mulf %7, %12 : vector<256x4xf32>
    %c0_7 = arith.constant 0 : index
    %c0_8 = arith.constant 0 : index
    %c0_9 = arith.constant 0 : index
    %14 = vector.load %arg5[%c0_7, %c0_8, %c0_9] : memref<1x256x4xf32, #tpu.memory_space<vmem>>, vector<1x256x4xf32>
    %15 = vector.shape_cast %14 : vector<1x256x4xf32> to vector<256x4xf32>
    %16 = vector.shape_cast %13 : vector<256x4xf32> to vector<1x256x4xf32>
    tpu.vector_store %arg5[%c0_7, %c0_8, %c0_9], %16 {strides = array<i32>} : memref<1x256x4xf32, #tpu.memory_space<vmem>>, vector<1x256x4xf32>,
    return
  }
  func.func @transform_0(%arg0: i32, %arg1: i32) -> (i32, i32, i32) {
    %c0_i32 = arith.constant 0 : i32
    %c0_i32_0 = arith.constant 0 : i32
    return %arg0, %arg1, %c0_i32 : i32, i32, i32
  }
  func.func @transform_1(%arg0: i32, %arg1: i32) -> (i32, i32) {
    %c0_i32 = arith.constant 0 : i32
    %c0_i32_0 = arith.constant 0 : i32
    %c0_i32_1 = arith.constant 0 : i32
    return %c0_i32, %c0_i32_0 : i32, i32
  }
  func.func @transform_2(%arg0: i32, %arg1: i32) -> (i32, i32) {
    %c0_i32 = arith.constant 0 : i32
    %c0_i32_0 = arith.constant 0 : i32
    %c0_i32_1 = arith.constant 0 : i32
    return %c0_i32, %c0_i32_0 : i32, i32
  }
  func.func @transform_3(%arg0: i32, %arg1: i32) -> (i32, i32, i32) {
    %c0_i32 = arith.constant 0 : i32
    %c0_i32_0 = arith.constant 0 : i32
    return %arg0, %arg1, %c0_i32 : i32, i32, i32
  }
}

</mosaic_0001>

<llo_original>
// kernel: tpu_custom_call.1
$region0: #{tpu_custom_call.1}
  #allocation0 [shape = 'u32[]', space=smem, size = 0x4, offset = 0x4, fixed_abs, tag = 'smem constant byte address 0x4 - core index']
  #allocation1 [shape = 'u32[144,128]{1,0:T(1,128)}', space=vmem, size = 0x12000, scoped, tag = 'internal scratch']
  %s0 = inlined_call_operand.vmem [shape: f32[2,256,8], index: 0, kind: input, shape index: {}]
  %s1 = inlined_call_operand.vmem [shape: bf16[8,4], index: 1, kind: input, shape index: {}]
  %s2 = inlined_call_operand.vmem [shape: f32[1,4], index: 2, kind: input, shape index: {}]
  %s3 = inlined_call_operand.vmem [shape: f32[2,256,4], index: 3, kind: output, shape index: {}]
  %s4 = sld [smem:[#allocation0]]
  $region45: #{tpu_custom_call.1} parent=0
    _
  %s6 = ssub.s32 1, %s4
  %s7 = scalar_select 0, %s6, %s4
  loop: start=0, step=1, limit=4
  $region2: #{tpu_custom_call.1} parent=0 // loop_pre_header
    _
  $region3: #{tpu_custom_call.1} parent=0 // loop_header
    %s9 = sphi 0, %s13
    %p10 = scmp.ge.s32.totalorder %s9, 4
    %s16 = sphi 0, %s28
    %s17 = sphi 0, %s24
    %s18 = sphi 0, %s16
    %s19 = sphi 0, %s17
    %s20 = sphi 0, %s18
    %s21 = sphi 0, %s19
    %s33 = sphi 0, %s35
    %s36 = sphi 0, %s33
    %s37 = sphi 0, %s36
    %s53 = sphi 0, %s37
    %s57 = sphi 0, %s57
    %s59 = sphi 0, %s57
    %s60 = sphi 0, %s59
    %s74 = sphi 0, %s60
    %s78 = sphi 0, %s78
    %s80 = sphi 0, %s78
    %s81 = sphi 0, %s80
    %s95 = sphi 0, %s81
    %s103 = sphi 0, %s105
    %s106 = sphi 0, %s103
    %s107 = sphi 0, %s106
    %s123 = sphi 0, %s107
  $region4: #{tpu_custom_call.1} parent=0 // loop_header_branch
    %12 = sbr.rel (%p10) target = $region8
  $region5: #{tpu_custom_call.1} parent=0 // loop_body
    %s14 = ssub.s32 %s9, 1
    %s15 = ssub.s32 %s9, 2
    %s22 = sadd.s32 1, %s17
    %p23 = scmp.ge.s32.totalorder %s22, 1
    %s24 = scalar_select %p23, 0, %s22
    %s25 = sadd.s32 1, %s16
    %s26 = scalar_select %p23, %s25, %s16
    %p27 = scmp.ge.s32.totalorder %s26, 2
    %s28 = scalar_select %p27, 0, %s26
    %s29 = ssub.s32 %s16, %s28
    %s30 = ssub.s32 %s17, %s24
    %s31 = sor.u32 %s29, %s30
    %p32 = scmp.eq.s32.totalorder %s31, 0
    %s34 = sadd.s32 %s33, 1
    %s35 = scalar_select %p32, %s33, %s34
    %p38 = pneg %p32
    %p39 = scmp.eq.s32.totalorder %s9, 1
    %p40 = por %p38, %p39
    %p41 = scmp.ne.s32.totalorder %s33, %s36
    %p42 = scmp.eq.s32.totalorder %s9, 0
    %p43 = por %p41, %p42
    %p44 = scmp.ne.s32.totalorder %s33, %s36
    %p45 = scmp.eq.s32.totalorder %s14, 1
    %p46 = por %p44, %p45
    %p47 = scmp.ne.s32.totalorder %s36, %s37
    %p48 = scmp.eq.s32.totalorder %s14, 0
    %p49 = por %p47, %p48
    %p50 = scmp.ne.s32.totalorder %s36, %s37
    %p51 = scmp.eq.s32.totalorder %s15, 1
    %p52 = por %p50, %p51
    %p54 = scmp.ne.s32.totalorder %s37, %s53
    %p55 = scmp.eq.s32.totalorder %s15, 0
    %p56 = por %p54, %p55
    %s58 = sadd.s32 %s57, 1
    %p61 = scmp.eq.s32.totalorder %s9, 1
    %p62 = scmp.ne.s32.totalorder %s57, %s59
    %p63 = scmp.eq.s32.totalorder %s9, 0
    %p64 = por %p62, %p63
    %p65 = scmp.ne.s32.totalorder %s57, %s59
    %p66 = scmp.eq.s32.totalorder %s14, 1
    %p67 = por %p65, %p66
    %p68 = scmp.ne.s32.totalorder %s59, %s60
    %p69 = scmp.eq.s32.totalorder %s14, 0
    %p70 = por %p68, %p69
    %p71 = scmp.ne.s32.totalorder %s59, %s60
    %p72 = scmp.eq.s32.totalorder %s15, 1
    %p73 = por %p71, %p72
    %p75 = scmp.ne.s32.totalorder %s60, %s74
    %p76 = scmp.eq.s32.totalorder %s15, 0
    %p77 = por %p75, %p76
    %s79 = sadd.s32 %s78, 1
    %p82 = scmp.eq.s32.totalorder %s9, 1
    %p83 = scmp.ne.s32.totalorder %s78, %s80
    %p84 = scmp.eq.s32.totalorder %s9, 0
    %p85 = por %p83, %p84
    %p86 = scmp.ne.s32.totalorder %s78, %s80
    %p87 = scmp.eq.s32.totalorder %s14, 1
    %p88 = por %p86, %p87
    %p89 = scmp.ne.s32.totalorder %s80, %s81
    %p90 = scmp.eq.s32.totalorder %s14, 0
    %p91 = por %p89, %p90
    %p92 = scmp.ne.s32.totalorder %s80, %s81
    %p93 = scmp.eq.s32.totalorder %s15, 1
    %p94 = por %p92, %p93
    %p96 = scmp.ne.s32.totalorder %s81, %s95
    %p97 = scmp.eq.s32.totalorder %s15, 0
    %p98 = por %p96, %p97
    %s99 = ssub.s32 %s16, %s28
    %s100 = ssub.s32 %s17, %s24
    %s101 = sor.u32 %s99, %s100
    %p102 = scmp.eq.s32.totalorder %s101, 0
    %s104 = sadd.s32 %s103, 1
    %s105 = scalar_select %p102, %s103, %s104
    %p108 = pneg %p102
    %p109 = scmp.eq.s32.totalorder %s9, 1
    %p110 = por %p108, %p109
    %p111 = scmp.ne.s32.totalorder %s103, %s106
    %p112 = scmp.eq.s32.totalorder %s9, 0
    %p113 = por %p111, %p112
    %p114 = scmp.ne.s32.totalorder %s103, %s106
    %p115 = scmp.eq.s32.totalorder %s14, 1
    %p116 = por %p114, %p115
    %p117 = scmp.ne.s32.totalorder %s106, %s107
    %p118 = scmp.eq.s32.totalorder %s14, 0
    %p119 = por %p117, %p118
    %p120 = scmp.ne.s32.totalorder %s106, %s107
    %p121 = scmp.eq.s32.totalorder %s15, 1
    %p122 = por %p120, %p121
    %p124 = scmp.ne.s32.totalorder %s107, %s123
    %p125 = scmp.eq.s32.totalorder %s15, 0
    %p126 = por %p124, %p125
    %p127 = scmp.le.s32.totalorder 1, %s9
    %p128 = scmp.lt.s32.totalorder %s9, 3
    %p129 = pnand %p127, %p128
    %p130 = pneg %p129
    // Predicated region
    $region9: #{tpu_custom_call.1} parent=5 // pred_check
      _
    $region10: #{tpu_custom_call.1} parent=5 // pred_check_branch
      %132 = sbr.rel (%p129) target = $region12
    $region11: #{tpu_custom_call.1} parent=5 // pred_region
      %s133 = ssub.s32 %s9, 1
      // Predicated region
      $region13: #{tpu_custom_call.1} parent=11 // pred_check
        %p134 = pneg %p70
      $region14: #{tpu_custom_call.1} parent=11 // pred_check_branch
        %136 = sbr.rel (%p134) target = $region16
      $region15: #{tpu_custom_call.1} parent=11 // pred_region
        _
      $region16: #{tpu_custom_call.1} parent=11 // pred_fallthru
        _
      // Predicated region
      $region17: #{tpu_custom_call.1} parent=11 // pred_check
        %p137 = pneg %p91
      $region18: #{tpu_custom_call.1} parent=11 // pred_check_branch
        %139 = sbr.rel (%p137) target = $region20
      $region19: #{tpu_custom_call.1} parent=11 // pred_region
        _
      $region20: #{tpu_custom_call.1} parent=11 // pred_fallthru
        _
    $region12: #{tpu_custom_call.1} parent=5 // pred_fallthru
      _
    %p140 = scmp.lt.s32.totalorder %s9, 2
    // Predicated region
    $region21: #{tpu_custom_call.1} parent=5 // pred_check
      %p141 = pneg %p140
    $region22: #{tpu_custom_call.1} parent=5 // pred_check_branch
      %143 = sbr.rel (%p141) target = $region24
    $region23: #{tpu_custom_call.1} parent=5 // pred_region
      // Predicated region
      $region25: #{tpu_custom_call.1} parent=23 // pred_check
        %p144 = pneg %p43
      $region26: #{tpu_custom_call.1} parent=23 // pred_check_branch
        %146 = sbr.rel (%p144) target = $region28
      $region27: #{tpu_custom_call.1} parent=23 // pred_region
        %s147 = smul.u32 32, %s17
        %p148 = scmp.lt.s32.totalorder %s16, 1
        %s149 = scalar_select %p148, %s16, 1
        %p150 = scmp.lt.s32.totalorder %s147, 31
        %s151 = scalar_select %p150, %s147, 31
        %s152 = smul.addr %s149, 32
        %s153 = sadd.s32 %s151, %s152
        %s154 = smul.addr %s153, 8
        %s155 = scalar_lea.vmem %s0, %s154
        %s156 = smul.u32 32, %s17
      $region28: #{tpu_custom_call.1} parent=23 // pred_fallthru
        _
    $region24: #{tpu_custom_call.1} parent=5 // pred_fallthru
      _
    %p157 = scmp.le.s32.totalorder 1, %s9
    %p158 = scmp.lt.s32.totalorder %s9, 3
    %p159 = pnand %p157, %p158
    %p160 = pneg %p159
    // Predicated region
    $region29: #{tpu_custom_call.1} parent=5 // pred_check
      _
    $region30: #{tpu_custom_call.1} parent=5 // pred_check_branch
      %162 = sbr.rel (%p159) target = $region32
    $region31: #{tpu_custom_call.1} parent=5 // pred_region
      %s163 = ssub.s32 %s9, 1
      %s164 = smul.u32 32, %s19
      %p165 = scmp.lt.s32.totalorder %s18, 1
      %s166 = scalar_select %p165, %s18, 1
      %p167 = scmp.lt.s32.totalorder %s164, 31
      %s168 = scalar_select %p167, %s164, 31
      %s169 = smul.addr %s166, 32
      %s170 = sadd.s32 %s168, %s169
      %s171 = smul.addr %s170, 8
      %s172 = scalar_lea.vmem %s0, %s171
      %p173 = pneg %p49
      %p174 = pneg %p46
      %p175 = pneg %p70
      %p176 = pneg %p67
      %p177 = pneg %p91
      %p178 = pneg %p88
      %p179 = pneg %p119
      %p180 = pneg %p116
      %s181 = smul.u32 32, %s19
      %p182 = scmp.lt.s32.totalorder %s18, 1
      %s183 = scalar_select %p182, %s18, 1
      %p184 = scmp.lt.s32.totalorder %s181, 31
      %s185 = scalar_select %p184, %s181, 31
      %s186 = smul.addr %s183, 32
      %s187 = sadd.s32 %s185, %s186
      %s188 = smul.addr %s187, 8
      %s189 = scalar_lea.vmem %s3, %s188
      %s190 = smul.u32 32, %s19
      %p191 = scmp.lt.s32.totalorder %s18, 1
      %s192 = scalar_select %p191, %s18, 1
      %p193 = scmp.lt.s32.totalorder %s190, 31
      %s194 = scalar_select %p193, %s190, 31
      %s195 = smul.addr %s192, 32
      %s196 = sadd.s32 %s194, %s195
      %s197 = smul.addr %s196, 8
      %s198 = scalar_lea.vmem %s0, %s197
      %s199 = smul.u32 32, %s19
      %s200 = smul.u32 32, %s19
      %p201 = scmp.lt.s32.totalorder %s18, 1
      %s202 = scalar_select %p201, %s18, 1
      %p203 = scmp.lt.s32.totalorder %s200, 31
      %s204 = scalar_select %p203, %s200, 31
      %s205 = smul.addr %s202, 32
      %s206 = sadd.s32 %s204, %s205
      %s207 = smul.addr %s206, 8
      %s208 = scalar_lea.vmem %s3, %s207
      %s209 = smul.u32 32, %s19
      %v211 = vld [vmem:[%s198] sm:$0xff]
      %v212 = vld [vmem:[%s198 + $0x8] sm:$0xff]
      %v213 = vld [vmem:[%s198 + $0x10] sm:$0xff]
      %v214 = vld [vmem:[%s198 + $0x18] sm:$0xff]
      %v215 = vld [vmem:[%s198 + $0x20] sm:$0xff]
      %v216 = vld [vmem:[%s198 + $0x28] sm:$0xff]
      %v217 = vld [vmem:[%s198 + $0x30] sm:$0xff]
      %v218 = vld [vmem:[%s198 + $0x38] sm:$0xff]
      %v219 = vld [vmem:[%s198 + $0x40] sm:$0xff]
      %v220 = vld [vmem:[%s198 + $0x48] sm:$0xff]
      %v221 = vld [vmem:[%s198 + $0x50] sm:$0xff]
      %v222 = vld [vmem:[%s198 + $0x58] sm:$0xff]
      %v223 = vld [vmem:[%s198 + $0x60] sm:$0xff]
      %v224 = vld [vmem:[%s198 + $0x68] sm:$0xff]
      %v225 = vld [vmem:[%s198 + $0x70] sm:$0xff]
      %v226 = vld [vmem:[%s198 + $0x78] sm:$0xff]
      %v227 = vld [vmem:[%s198 + $0x80] sm:$0xff]
      %v228 = vld [vmem:[%s198 + $0x88] sm:$0xff]
      %v229 = vld [vmem:[%s198 + $0x90] sm:$0xff]
      %v230 = vld [vmem:[%s198 + $0x98] sm:$0xff]
      %v231 = vld [vmem:[%s198 + $0xa0] sm:$0xff]
      %v232 = vld [vmem:[%s198 + $0xa8] sm:$0xff]
      %v233 = vld [vmem:[%s198 + $0xb0] sm:$0xff]
      %v234 = vld [vmem:[%s198 + $0xb8] sm:$0xff]
      %v235 = vld [vmem:[%s198 + $0xc0] sm:$0xff]
      %v236 = vld [vmem:[%s198 + $0xc8] sm:$0xff]
      %v237 = vld [vmem:[%s198 + $0xd0] sm:$0xff]
      %v238 = vld [vmem:[%s198 + $0xd8] sm:$0xff]
      %v239 = vld [vmem:[%s198 + $0xe0] sm:$0xff]
      %v240 = vld [vmem:[%s198 + $0xe8] sm:$0xff]
      %v241 = vld [vmem:[%s198 + $0xf0] sm:$0xff]
      %v242 = vld [vmem:[%s198 + $0xf8] sm:$0xff]
      %v243 = vpack.c.bf16 %v212, %v211
      %v244 = vpack.c.bf16 %v214, %v213
      %v245 = vpack.c.bf16 %v216, %v215
      %v246 = vpack.c.bf16 %v218, %v217
      %v247 = vpack.c.bf16 %v220, %v219
      %v248 = vpack.c.bf16 %v222, %v221
      %v249 = vpack.c.bf16 %v224, %v223
      %v250 = vpack.c.bf16 %v226, %v225
      %v251 = vpack.c.bf16 %v228, %v227
      %v252 = vpack.c.bf16 %v230, %v229
      %v253 = vpack.c.bf16 %v232, %v231
      %v254 = vpack.c.bf16 %v234, %v233
      %v255 = vpack.c.bf16 %v236, %v235
      %v256 = vpack.c.bf16 %v238, %v237
      %v257 = vpack.c.bf16 %v240, %v239
      %v258 = vpack.c.bf16 %v242, %v241
      %v259 = vld [vmem:[%s1] sm:$0xf]
      %v260 = vld [vmem:[%s2] sm:$0x1]
      %v262 = vlaneseq
      %v263 = vshrl.u32 %v262, 7
      %v264 = vsub.s32 0, %v263
      %v265 = vrot.slane %v260, %v264
      %vm267 = vcmask 64512
      %v269 = vsel %vm267, %v243, 0
      %v272 = vsel %vm267, %v244, 0
      %v275 = vsel %vm267, %v245, 0
      %v278 = vsel %vm267, %v246, 0
      %v281 = vsel %vm267, %v247, 0
      %v284 = vsel %vm267, %v248, 0
      %v287 = vsel %vm267, %v249, 0
      %v290 = vsel %vm267, %v250, 0
      %v293 = vsel %vm267, %v251, 0
      %v296 = vsel %vm267, %v252, 0
      %v299 = vsel %vm267, %v253, 0
      %v302 = vsel %vm267, %v254, 0
      %v305 = vsel %vm267, %v255, 0
      %v308 = vsel %vm267, %v256, 0
      %v311 = vsel %vm267, %v257, 0
      %v314 = vsel %vm267, %v258, 0
      %vm316 = vcmask 1043456
      %v318 = vsel %vm316, %v259, 0
      %320 = vmatprep.subr.bf16.mxu0 0
      %321 = vmatpush1.bf16.msra.mxu0 %v318
      %322 = vmatprep.subr.bf16.mxu0 0
      %323 = vmatpush1.bf16.msra.mxu0 0
      %324 = vmatprep.subr.bf16.mxu0 0
      %325 = vmatpush1.bf16.msra.mxu0 0
      %326 = vmatprep.subr.bf16.mxu0 0
      %327 = vmatpush1.bf16.msra.mxu0 0
      %328 = vmatprep.subr.bf16.mxu0 0
      %329 = vmatpush1.bf16.msra.mxu0 0
      %330 = vmatprep.subr.bf16.mxu0 0
      %331 = vmatpush1.bf16.msra.mxu0 0
      %332 = vmatprep.subr.bf16.mxu0 0
      %333 = vmatpush1.bf16.msra.mxu0 0
      %334 = vmatprep.subr.bf16.mxu0 0
      %335 = vmatpush1.bf16.msra.mxu0 0
      %336 = vmatprep.subr.bf16.mxu0 0
      %337 = vmatpush1.bf16.msra.mxu0 0
      %338 = vmatprep.subr.bf16.mxu0 0
      %339 = vmatpush1.bf16.msra.mxu0 0
      %340 = vmatprep.subr.bf16.mxu0 0
      %341 = vmatpush1.bf16.msra.mxu0 0
      %342 = vmatprep.subr.bf16.mxu0 0
      %343 = vmatpush1.bf16.msra.mxu0 0
      %344 = vmatprep.subr.bf16.mxu0 0
      %345 = vmatpush1.bf16.msra.mxu0 0
      %346 = vmatprep.subr.bf16.mxu0 0
      %347 = vmatpush1.bf16.msra.mxu0 0
      %348 = vmatprep.subr.bf16.mxu0 0
      %349 = vmatpush1.bf16.msra.mxu0 0
      %350 = vmatprep.subr.bf16.mxu0 0
      %351 = vmatpush1.bf16.msra.mxu0 0
      %352 = vmatprep.mubr.bf16.mxu0 0
      %353 = vmatmul.mubr.bf16.gmra.mrb[0].mxu0 %v269
      %v354 = vpop.f32.mrb[0].mxu0
      %v355 = vadd.f32 %v265, %v354
      %v356 = vpop.f32.mrb[0].mxu0
      %v357 = vpop.f32.mrb[0].mxu0
      %v358 = vadd.f32 %v265, %v357
      %v359 = vpop.f32.mrb[0].mxu0
      %360 = vmatprep.mubr.bf16.mxu0 0
      %361 = vmatmul.mubr.bf16.gmra.mrb[0].mxu0 %v272
      %v362 = vpop.f32.mrb[0].mxu0
      %v363 = vadd.f32 %v265, %v362
      %v364 = vpop.f32.mrb[0].mxu0
      %v365 = vpop.f32.mrb[0].mxu0
      %v366 = vadd.f32 %v265, %v365
      %v367 = vpop.f32.mrb[0].mxu0
      %368 = vmatprep.mubr.bf16.mxu0 0
      %369 = vmatmul.mubr.bf16.gmra.mrb[0].mxu0 %v275
      %v370 = vpop.f32.mrb[0].mxu0
      %v371 = vadd.f32 %v265, %v370
      %v372 = vpop.f32.mrb[0].mxu0
      %v373 = vpop.f32.mrb[0].mxu0
      %v374 = vadd.f32 %v265, %v373
      %v375 = vpop.f32.mrb[0].mxu0
      %376 = vmatprep.mubr.bf16.mxu0 0
      %377 = vmatmul.mubr.bf16.gmra.mrb[0].mxu0 %v278
      %v378 = vpop.f32.mrb[0].mxu0
      %v379 = vadd.f32 %v265, %v378
      %v380 = vpop.f32.mrb[0].mxu0
      %v381 = vpop.f32.mrb[0].mxu0
      %v382 = vadd.f32 %v265, %v381
      %v383 = vpop.f32.mrb[0].mxu0
      %384 = vmatprep.mubr.bf16.mxu0 0
      %385 = vmatmul.mubr.bf16.gmra.mrb[0].mxu0 %v281
      %v386 = vpop.f32.mrb[0].mxu0
      %v387 = vadd.f32 %v265, %v386
      %v388 = vpop.f32.mrb[0].mxu0
      %v389 = vpop.f32.mrb[0].mxu0
      %v390 = vadd.f32 %v265, %v389
      %v391 = vpop.f32.mrb[0].mxu0
      %392 = vmatprep.mubr.bf16.mxu0 0
      %393 = vmatmul.mubr.bf16.gmra.mrb[0].mxu0 %v284
      %v394 = vpop.f32.mrb[0].mxu0
      %v395 = vadd.f32 %v265, %v394
      %v396 = vpop.f32.mrb[0].mxu0
      %v397 = vpop.f32.mrb[0].mxu0
      %v398 = vadd.f32 %v265, %v397
      %v399 = vpop.f32.mrb[0].mxu0
      %400 = vmatprep.mubr.bf16.mxu0 0
      %401 = vmatmul.mubr.bf16.gmra.mrb[0].mxu0 %v287
      %v402 = vpop.f32.mrb[0].mxu0
      %v403 = vadd.f32 %v265, %v402
      %v404 = vpop.f32.mrb[0].mxu0
      %v405 = vpop.f32.mrb[0].mxu0
      %v406 = vadd.f32 %v265, %v405
      %v407 = vpop.f32.mrb[0].mxu0
      %408 = vmatprep.mubr.bf16.mxu0 0
      %409 = vmatmul.mubr.bf16.gmra.mrb[0].mxu0 %v290
      %v410 = vpop.f32.mrb[0].mxu0
      %v411 = vadd.f32 %v265, %v410
      %v412 = vpop.f32.mrb[0].mxu0
      %v413 = vpop.f32.mrb[0].mxu0
      %v414 = vadd.f32 %v265, %v413
      %v415 = vpop.f32.mrb[0].mxu0
      %416 = vmatprep.mubr.bf16.mxu0 0
      %417 = vmatmul.mubr.bf16.gmra.mrb[0].mxu0 %v293
      %v418 = vpop.f32.mrb[0].mxu0
      %v419 = vadd.f32 %v265, %v418
      %v420 = vpop.f32.mrb[0].mxu0
      %v421 = vpop.f32.mrb[0].mxu0
      %v422 = vadd.f32 %v265, %v421
      %v423 = vpop.f32.mrb[0].mxu0
      %424 = vmatprep.mubr.bf16.mxu0 0
      %425 = vmatmul.mubr.bf16.gmra.mrb[0].mxu0 %v296
      %v426 = vpop.f32.mrb[0].mxu0
      %v427 = vadd.f32 %v265, %v426
      %v428 = vpop.f32.mrb[0].mxu0
      %v429 = vpop.f32.mrb[0].mxu0
      %v430 = vadd.f32 %v265, %v429
      %v431 = vpop.f32.mrb[0].mxu0
      %432 = vmatprep.mubr.bf16.mxu0 0
      %433 = vmatmul.mubr.bf16.gmra.mrb[0].mxu0 %v299
      %v434 = vpop.f32.mrb[0].mxu0
      %v435 = vadd.f32 %v265, %v434
      %v436 = vpop.f32.mrb[0].mxu0
      %v437 = vpop.f32.mrb[0].mxu0
      %v438 = vadd.f32 %v265, %v437
      %v439 = vpop.f32.mrb[0].mxu0
      %440 = vmatprep.mubr.bf16.mxu0 0
      %441 = vmatmul.mubr.bf16.gmra.mrb[0].mxu0 %v302
      %v442 = vpop.f32.mrb[0].mxu0
      %v443 = vadd.f32 %v265, %v442
      %v444 = vpop.f32.mrb[0].mxu0
      %v445 = vpop.f32.mrb[0].mxu0
      %v446 = vadd.f32 %v265, %v445
      %v447 = vpop.f32.mrb[0].mxu0
      %448 = vmatprep.mubr.bf16.mxu0 0
      %449 = vmatmul.mubr.bf16.gmra.mrb[0].mxu0 %v305
      %v450 = vpop.f32.mrb[0].mxu0
      %v451 = vadd.f32 %v265, %v450
      %v452 = vpop.f32.mrb[0].mxu0
      %v453 = vpop.f32.mrb[0].mxu0
      %v454 = vadd.f32 %v265, %v453
      %v455 = vpop.f32.mrb[0].mxu0
      %456 = vmatprep.mubr.bf16.mxu0 0
      %457 = vmatmul.mubr.bf16.gmra.mrb[0].mxu0 %v308
      %v458 = vpop.f32.mrb[0].mxu0
      %v459 = vadd.f32 %v265, %v458
      %v460 = vpop.f32.mrb[0].mxu0
      %v461 = vpop.f32.mrb[0].mxu0
      %v462 = vadd.f32 %v265, %v461
      %v463 = vpop.f32.mrb[0].mxu0
      %464 = vmatprep.mubr.bf16.mxu0 0
      %465 = vmatmul.mubr.bf16.gmra.mrb[0].mxu0 %v311
      %v466 = vpop.f32.mrb[0].mxu0
      %v467 = vadd.f32 %v265, %v466
      %v468 = vpop.f32.mrb[0].mxu0
      %v469 = vpop.f32.mrb[0].mxu0
      %v470 = vadd.f32 %v265, %v469
      %v471 = vpop.f32.mrb[0].mxu0
      %472 = vmatprep.mubr.bf16.mxu0 0
      %473 = vmatmul.mubr.bf16.gmra.mrb[0].mxu0 %v314
      %v474 = vpop.f32.mrb[0].mxu0
      %v475 = vadd.f32 %v265, %v474
      %v476 = vpop.f32.mrb[0].mxu0
      %v477 = vpop.f32.mrb[0].mxu0
      %v478 = vadd.f32 %v265, %v477
      %v479 = vpop.f32.mrb[0].mxu0
      %480 = vdwg.mxu0
      %v481 = vxor.u32 %v355, 2147483648
      %v482 = vxor.u32 %v358, 2147483648
      %v483 = vxor.u32 %v363, 2147483648
      %v484 = vxor.u32 %v366, 2147483648
      %v485 = vxor.u32 %v371, 2147483648
      %v486 = vxor.u32 %v374, 2147483648
      %v487 = vxor.u32 %v379, 2147483648
      %v488 = vxor.u32 %v382, 2147483648
      %v489 = vxor.u32 %v387, 2147483648
      %v490 = vxor.u32 %v390, 2147483648
      %v491 = vxor.u32 %v395, 2147483648
      %v492 = vxor.u32 %v398, 2147483648
      %v493 = vxor.u32 %v403, 2147483648
      %v494 = vxor.u32 %v406, 2147483648
      %v495 = vxor.u32 %v411, 2147483648
      %v496 = vxor.u32 %v414, 2147483648
      %v497 = vxor.u32 %v419, 2147483648
      %v498 = vxor.u32 %v422, 2147483648
      %v499 = vxor.u32 %v427, 2147483648
      %v500 = vxor.u32 %v430, 2147483648
      %v501 = vxor.u32 %v435, 2147483648
      %v502 = vxor.u32 %v438, 2147483648
      %v503 = vxor.u32 %v443, 2147483648
      %v504 = vxor.u32 %v446, 2147483648
      %v505 = vxor.u32 %v451, 2147483648
      %v506 = vxor.u32 %v454, 2147483648
      %v507 = vxor.u32 %v459, 2147483648
      %v508 = vxor.u32 %v462, 2147483648
      %v509 = vxor.u32 %v467, 2147483648
      %v510 = vxor.u32 %v470, 2147483648
      %v511 = vxor.u32 %v475, 2147483648
      %v512 = vxor.u32 %v478, 2147483648
      %v513 = vmul.f32 %v481, 1.442695
      %v514 = vpow.pop %v513
      %v515 = vmul.f32 %v482, 1.442695
      %v516 = vpow.pop %v515
      %v517 = vmul.f32 %v483, 1.442695
      %v518 = vpow.pop %v517
      %v519 = vmul.f32 %v484, 1.442695
      %v520 = vpow.pop %v519
      %v521 = vmul.f32 %v485, 1.442695
      %v522 = vpow.pop %v521
      %v523 = vmul.f32 %v486, 1.442695
      %v524 = vpow.pop %v523
      %v525 = vmul.f32 %v487, 1.442695
      %v526 = vpow.pop %v525
      %v527 = vmul.f32 %v488, 1.442695
      %v528 = vpow.pop %v527
      %v529 = vmul.f32 %v489, 1.442695
      %v530 = vpow.pop %v529
      %v531 = vmul.f32 %v490, 1.442695
      %v532 = vpow.pop %v531
      %v533 = vmul.f32 %v491, 1.442695
      %v534 = vpow.pop %v533
      %v535 = vmul.f32 %v492, 1.442695
      %v536 = vpow.pop %v535
      %v537 = vmul.f32 %v493, 1.442695
      %v538 = vpow.pop %v537
      %v539 = vmul.f32 %v494, 1.442695
      %v540 = vpow.pop %v539
      %v541 = vmul.f32 %v495, 1.442695
      %v542 = vpow.pop %v541
      %v543 = vmul.f32 %v496, 1.442695
      %v544 = vpow.pop %v543
      %v545 = vmul.f32 %v497, 1.442695
      %v546 = vpow.pop %v545
      %v547 = vmul.f32 %v498, 1.442695
      %v548 = vpow.pop %v547
      %v549 = vmul.f32 %v499, 1.442695
      %v550 = vpow.pop %v549
      %v551 = vmul.f32 %v500, 1.442695
      %v552 = vpow.pop %v551
      %v553 = vmul.f32 %v501, 1.442695
      %v554 = vpow.pop %v553
      %v555 = vmul.f32 %v502, 1.442695
      %v556 = vpow.pop %v555
      %v557 = vmul.f32 %v503, 1.442695
      %v558 = vpow.pop %v557
      %v559 = vmul.f32 %v504, 1.442695
      %v560 = vpow.pop %v559
      %v561 = vmul.f32 %v505, 1.442695
      %v562 = vpow.pop %v561
      %v563 = vmul.f32 %v506, 1.442695
      %v564 = vpow.pop %v563
      %v565 = vmul.f32 %v507, 1.442695
      %v566 = vpow.pop %v565
      %v567 = vmul.f32 %v508, 1.442695
      %v568 = vpow.pop %v567
      %v569 = vmul.f32 %v509, 1.442695
      %v570 = vpow.pop %v569
      %v571 = vmul.f32 %v510, 1.442695
      %v572 = vpow.pop %v571
      %v573 = vmul.f32 %v511, 1.442695
      %v574 = vpow.pop %v573
      %v575 = vmul.f32 %v512, 1.442695
      %v576 = vpow.pop %v575
      %v577 = vadd.f32 %v514, 1.0
      %v578 = vadd.f32 %v516, 1.0
      %v579 = vadd.f32 %v518, 1.0
      %v580 = vadd.f32 %v520, 1.0
      %v581 = vadd.f32 %v522, 1.0
      %v582 = vadd.f32 %v524, 1.0
      %v583 = vadd.f32 %v526, 1.0
      %v584 = vadd.f32 %v528, 1.0
      %v585 = vadd.f32 %v530, 1.0
      %v586 = vadd.f32 %v532, 1.0
      %v587 = vadd.f32 %v534, 1.0
      %v588 = vadd.f32 %v536, 1.0
      %v589 = vadd.f32 %v538, 1.0
      %v590 = vadd.f32 %v540, 1.0
      %v591 = vadd.f32 %v542, 1.0
      %v592 = vadd.f32 %v544, 1.0
      %v593 = vadd.f32 %v546, 1.0
      %v594 = vadd.f32 %v548, 1.0
      %v595 = vadd.f32 %v550, 1.0
      %v596 = vadd.f32 %v552, 1.0
      %v597 = vadd.f32 %v554, 1.0
      %v598 = vadd.f32 %v556, 1.0
      %v599 = vadd.f32 %v558, 1.0
      %v600 = vadd.f32 %v560, 1.0
      %v601 = vadd.f32 %v562, 1.0
      %v602 = vadd.f32 %v564, 1.0
      %v603 = vadd.f32 %v566, 1.0
      %v604 = vadd.f32 %v568, 1.0
      %v605 = vadd.f32 %v570, 1.0
      %v606 = vadd.f32 %v572, 1.0
      %v607 = vadd.f32 %v574, 1.0
      %v608 = vadd.f32 %v576, 1.0
      %v609 = vrcp.pop %v577
      %v610 = vmul.f32 1.0, %v609
      %v611 = vrcp.pop %v578
      %v612 = vmul.f32 1.0, %v611
      %v613 = vrcp.pop %v579
      %v614 = vmul.f32 1.0, %v613
      %v615 = vrcp.pop %v580
      %v616 = vmul.f32 1.0, %v615
      %v617 = vrcp.pop %v581
      %v618 = vmul.f32 1.0, %v617
      %v619 = vrcp.pop %v582
      %v620 = vmul.f32 1.0, %v619
      %v621 = vrcp.pop %v583
      %v622 = vmul.f32 1.0, %v621
      %v623 = vrcp.pop %v584
      %v624 = vmul.f32 1.0, %v623
      %v625 = vrcp.pop %v585
      %v626 = vmul.f32 1.0, %v625
      %v627 = vrcp.pop %v586
      %v628 = vmul.f32 1.0, %v627
      %v629 = vrcp.pop %v587
      %v630 = vmul.f32 1.0, %v629
      %v631 = vrcp.pop %v588
      %v632 = vmul.f32 1.0, %v631
      %v633 = vrcp.pop %v589
      %v634 = vmul.f32 1.0, %v633
      %v635 = vrcp.pop %v590
      %v636 = vmul.f32 1.0, %v635
      %v637 = vrcp.pop %v591
      %v638 = vmul.f32 1.0, %v637
      %v639 = vrcp.pop %v592
      %v640 = vmul.f32 1.0, %v639
      %v641 = vrcp.pop %v593
      %v642 = vmul.f32 1.0, %v641
      %v643 = vrcp.pop %v594
      %v644 = vmul.f32 1.0, %v643
      %v645 = vrcp.pop %v595
      %v646 = vmul.f32 1.0, %v645
      %v647 = vrcp.pop %v596
      %v648 = vmul.f32 1.0, %v647
      %v649 = vrcp.pop %v597
      %v650 = vmul.f32 1.0, %v649
      %v651 = vrcp.pop %v598
      %v652 = vmul.f32 1.0, %v651
      %v653 = vrcp.pop %v599
      %v654 = vmul.f32 1.0, %v653
      %v655 = vrcp.pop %v600
      %v656 = vmul.f32 1.0, %v655
      %v657 = vrcp.pop %v601
      %v658 = vmul.f32 1.0, %v657
      %v659 = vrcp.pop %v602
      %v660 = vmul.f32 1.0, %v659
      %v661 = vrcp.pop %v603
      %v662 = vmul.f32 1.0, %v661
      %v663 = vrcp.pop %v604
      %v664 = vmul.f32 1.0, %v663
      %v665 = vrcp.pop %v605
      %v666 = vmul.f32 1.0, %v665
      %v667 = vrcp.pop %v606
      %v668 = vmul.f32 1.0, %v667
      %v669 = vrcp.pop %v607
      %v670 = vmul.f32 1.0, %v669
      %v671 = vrcp.pop %v608
      %v672 = vmul.f32 1.0, %v671
      %v673 = vmul.f32 %v355, %v610
      %v674 = vmul.f32 %v358, %v612
      %v675 = vmul.f32 %v363, %v614
      %v676 = vmul.f32 %v366, %v616
      %v677 = vmul.f32 %v371, %v618
      %v678 = vmul.f32 %v374, %v620
      %v679 = vmul.f32 %v379, %v622
      %v680 = vmul.f32 %v382, %v624
      %v681 = vmul.f32 %v387, %v626
      %v682 = vmul.f32 %v390, %v628
      %v683 = vmul.f32 %v395, %v630
      %v684 = vmul.f32 %v398, %v632
      %v685 = vmul.f32 %v403, %v634
      %v686 = vmul.f32 %v406, %v636
      %v687 = vmul.f32 %v411, %v638
      %v688 = vmul.f32 %v414, %v640
      %v689 = vmul.f32 %v419, %v642
      %v690 = vmul.f32 %v422, %v644
      %v691 = vmul.f32 %v427, %v646
      %v692 = vmul.f32 %v430, %v648
      %v693 = vmul.f32 %v435, %v650
      %v694 = vmul.f32 %v438, %v652
      %v695 = vmul.f32 %v443, %v654
      %v696 = vmul.f32 %v446, %v656
      %v697 = vmul.f32 %v451, %v658
      %v698 = vmul.f32 %v454, %v660
      %v699 = vmul.f32 %v459, %v662
      %v700 = vmul.f32 %v462, %v664
      %v701 = vmul.f32 %v467, %v666
      %v702 = vmul.f32 %v470, %v668
      %v703 = vmul.f32 %v475, %v670
      %v704 = vmul.f32 %v478, %v672
      %vm705 = vcmask 31744
      %706 = vst.msk [vmem:[%s208] sm:$0xff] %vm705, %v673
      %707 = vst.msk [vmem:[%s208 + $0x8] sm:$0xff] %vm705, %v674
      %708 = vst.msk [vmem:[%s208 + $0x10] sm:$0xff] %vm705, %v675
      %709 = vst.msk [vmem:[%s208 + $0x18] sm:$0xff] %vm705, %v676
      %710 = vst.msk [vmem:[%s208 + $0x20] sm:$0xff] %vm705, %v677
      %711 = vst.msk [vmem:[%s208 + $0x28] sm:$0xff] %vm705, %v678
      %712 = vst.msk [vmem:[%s208 + $0x30] sm:$0xff] %vm705, %v679
      %713 = vst.msk [vmem:[%s208 + $0x38] sm:$0xff] %vm705, %v680
      %714 = vst.msk [vmem:[%s208 + $0x40] sm:$0xff] %vm705, %v681
      %715 = vst.msk [vmem:[%s208 + $0x48] sm:$0xff] %vm705, %v682
      %716 = vst.msk [vmem:[%s208 + $0x50] sm:$0xff] %vm705, %v683
      %717 = vst.msk [vmem:[%s208 + $0x58] sm:$0xff] %vm705, %v684
      %718 = vst.msk [vmem:[%s208 + $0x60] sm:$0xff] %vm705, %v685
      %719 = vst.msk [vmem:[%s208 + $0x68] sm:$0xff] %vm705, %v686
      %720 = vst.msk [vmem:[%s208 + $0x70] sm:$0xff] %vm705, %v687
      %721 = vst.msk [vmem:[%s208 + $0x78] sm:$0xff] %vm705, %v688
      %722 = vst.msk [vmem:[%s208 + $0x80] sm:$0xff] %vm705, %v689
      %723 = vst.msk [vmem:[%s208 + $0x88] sm:$0xff] %vm705, %v690
      %724 = vst.msk [vmem:[%s208 + $0x90] sm:$0xff] %vm705, %v691
      %725 = vst.msk [vmem:[%s208 + $0x98] sm:$0xff] %vm705, %v692
      %726 = vst.msk [vmem:[%s208 + $0xa0] sm:$0xff] %vm705, %v693
      %727 = vst.msk [vmem:[%s208 + $0xa8] sm:$0xff] %vm705, %v694
      %728 = vst.msk [vmem:[%s208 + $0xb0] sm:$0xff] %vm705, %v695
      %729 = vst.msk [vmem:[%s208 + $0xb8] sm:$0xff] %vm705, %v696
      %730 = vst.msk [vmem:[%s208 + $0xc0] sm:$0xff] %vm705, %v697
      %731 = vst.msk [vmem:[%s208 + $0xc8] sm:$0xff] %vm705, %v698
      %732 = vst.msk [vmem:[%s208 + $0xd0] sm:$0xff] %vm705, %v699
      %733 = vst.msk [vmem:[%s208 + $0xd8] sm:$0xff] %vm705, %v700
      %734 = vst.msk [vmem:[%s208 + $0xe0] sm:$0xff] %vm705, %v701
      %735 = vst.msk [vmem:[%s208 + $0xe8] sm:$0xff] %vm705, %v702
      %736 = vst.msk [vmem:[%s208 + $0xf0] sm:$0xff] %vm705, %v703
      %737 = vst.msk [vmem:[%s208 + $0xf8] sm:$0xff] %vm705, %v704
      %s738 = smul.u32 32, %s19
      %p739 = scmp.lt.s32.totalorder %s18, 1
      %s740 = scalar_select %p739, %s18, 1
      %p741 = scmp.lt.s32.totalorder %s738, 31
      %s742 = scalar_select %p741, %s738, 31
      %s743 = smul.addr %s740, 32
      %s744 = sadd.s32 %s742, %s743
      %s745 = smul.addr %s744, 8
      %s746 = scalar_lea.vmem %s3, %s745
      // Predicated region
      $region33: #{tpu_custom_call.1} parent=31 // pred_check
        %p747 = pneg %p116
      $region34: #{tpu_custom_call.1} parent=31 // pred_check_branch
        %749 = sbr.rel (%p747) target = $region36
      $region35: #{tpu_custom_call.1} parent=31 // pred_region
        %s750 = smul.u32 32, %s19
      $region36: #{tpu_custom_call.1} parent=31 // pred_fallthru
        _
    $region32: #{tpu_custom_call.1} parent=5 // pred_fallthru
      _
    %p751 = scmp.le.s32.totalorder 2, %s9
    // Predicated region
    $region37: #{tpu_custom_call.1} parent=5 // pred_check
      %p752 = pneg %p751
    $region38: #{tpu_custom_call.1} parent=5 // pred_check_branch
      %754 = sbr.rel (%p752) target = $region40
    $region39: #{tpu_custom_call.1} parent=5 // pred_region
      %s755 = ssub.s32 %s9, 2
      // Predicated region
      $region41: #{tpu_custom_call.1} parent=39 // pred_check
        %p756 = pneg %p122
      $region42: #{tpu_custom_call.1} parent=39 // pred_check_branch
        %758 = sbr.rel (%p756) target = $region44
      $region43: #{tpu_custom_call.1} parent=39 // pred_region
        %s759 = smul.u32 32, %s21
        %p760 = scmp.lt.s32.totalorder %s20, 1
        %s761 = scalar_select %p760, %s20, 1
        %p762 = scmp.lt.s32.totalorder %s759, 31
        %s763 = scalar_select %p762, %s759, 31
        %s764 = smul.addr %s761, 32
        %s765 = sadd.s32 %s763, %s764
        %s766 = smul.addr %s765, 8
        %s767 = scalar_lea.vmem %s3, %s766
      $region44: #{tpu_custom_call.1} parent=39 // pred_fallthru
        _
    $region40: #{tpu_custom_call.1} parent=5 // pred_fallthru
      _
  $region6: #{tpu_custom_call.1} parent=0 // loop_footer
    %s13 = sadd.s32 1, %s9
  $region7: #{tpu_custom_call.1} parent=0 // loop_footer_branch
    %8 = sbr.rel target = $region3
  $region8: #{tpu_custom_call.1} parent=0 // loop_exit
    _

</llo_original>
